<compile_context>
chip_gen: v6e
topology: v6e:2x2x1
jax: 0.10.0
libtpu: 0.0.40
codegen_flags: <defaults>
</compile_context>

<pallas_src>
import jax
import jax.numpy as jnp
from jax.experimental import pallas as pl
from jax.experimental.pallas import tpu as pltpu


def _make_coupling_kernel(group: int, d: int):
    """Builds the fused kernel body; `group` and `d` are trace-time constants."""

    def kernel(a_ref, xfull_ref, xi_ref, w_ref, o_ref, yin_ref):
        g = pl.program_id(0)

        # Initialize the carried accumulator y_in = sum(xs[1:]) on the first group step only.
        @pl.when(g == 0)
        def _init():
            if group > 1:
                acc = xfull_ref[:, d:2 * d]
                for j in range(2, group):        # static unroll over remaining chunks
                    acc = acc + xfull_ref[:, j * d:(j + 1) * d]
            else:
                acc = jnp.zeros((xfull_ref.shape[0], d), jnp.float32)
            yin_ref[...] = acc.astype(jnp.float32)

        # f_g(graph, y_in) = A_hat @ (y_in @ W_g)   (two MXU matmuls, f32 accumulation)
        h = jnp.dot(yin_ref[...], w_ref[...], preferred_element_type=jnp.float32)
        fmd = jnp.dot(a_ref[...], h, preferred_element_type=jnp.float32)

        # y_g = x_g + f_g(...), written into the g-th D-wide column chunk of the [N, F] output,
        # and carried as the next y_in.
        y = xi_ref[...] + fmd
        o_ref[...] = y.astype(o_ref.dtype)
        yin_ref[...] = y

    return kernel


def group_additive_coupling_forward(x, a_hat, weights, group=2):
    """Fused forward of GroupAdditiveCoupling with GCN-style func modules."""
    n, f = x.shape
    assert f % group == 0, "feature dim must be divisible by group"
    d = f // group
    w_stacked = jnp.stack(weights, axis=0)  # [group, D, D]

    kernel = _make_coupling_kernel(group, d)

    return pl.pallas_call(
        kernel,
        out_shape=jax.ShapeDtypeStruct((n, f), x.dtype),
        grid_spec=pltpu.PrefetchScalarGridSpec(
            num_scalar_prefetch=0,
            grid=(group,),
            in_specs=[
                # A_hat: same block every step -> DMA'd once, VMEM-resident.
                pl.BlockSpec((n, n), lambda g: (0, 0)),
                # Full x: same block every step; read only at g == 0 to build the initial y_in.
                pl.BlockSpec((n, f), lambda g: (0, 0)),
                # x_g: the g-th D-wide column chunk of x.
                pl.BlockSpec((n, d), lambda g: (0, g)),
                # W_g: squeezed leading (group) dim -> kernel sees a [D, D] tile.
                pl.BlockSpec((pl.Squeezed(), d, d), lambda g: (g, 0, 0)),
            ],
            # y_g written into the g-th D-wide column chunk of the single [N, F] output slab.
            out_specs=pl.BlockSpec((n, d), lambda g: (0, g)),
            # Carried y_in accumulator (persists across grid iterations).
            scratch_shapes=[pltpu.VMEM((n, d), jnp.float32)],
        ),
        compiler_params=pltpu.CompilerParams(
            dimension_semantics=("arbitrary",),  # group steps are sequential (carried state)
            vmem_limit_bytes=64 * 1024 * 1024,
        ),
    )(a_hat, x, x, w_stacked)


def _reference_forward(x, a_hat, weights, group=2):
    """Pure-JAX reference mirroring the PyTorch module."""
    hp = jax.lax.Precision.HIGHEST
    xs = jnp.split(x, group, axis=-1)
    y_in = xs[1]
    for j in range(2, group):
        y_in = y_in + xs[j]
    ys = []
    for i in range(group):
        fmd = jnp.dot(a_hat, jnp.dot(y_in, weights[i], precision=hp), precision=hp)
        y = xs[i] + fmd
        y_in = y
        ys.append(y)
    return jnp.concatenate(ys, axis=-1)


def _make_norm_adjacency(n_nodes):
    """Deterministic synthetic graph: ring + self loops, symmetrically normalized."""
    idx = jnp.arange(n_nodes)
    adj = jnp.zeros((n_nodes, n_nodes), jnp.float32)
    adj = adj.at[idx, (idx + 1) % n_nodes].set(1.0)
    adj = adj.at[(idx + 1) % n_nodes, idx].set(1.0)
    adj = adj + jnp.eye(n_nodes, dtype=jnp.float32)
    deg = adj.sum(axis=1)
    d_inv_sqrt = 1.0 / jnp.sqrt(deg)
    return adj * d_inv_sqrt[:, None] * d_inv_sqrt[None, :]


if __name__ == "__main__":
    key = jax.random.PRNGKey(0)
    group = 2
    n_nodes = 64                 # sublane-aligned (multiple of 8)
    d = 128                      # lane-dense chunk width (multiple of 128)
    feat = d * group             # total feature dim = 256

    k_x, k_w0, k_w1 = jax.random.split(key, 3)
    x = jax.random.normal(k_x, (n_nodes, feat), dtype=jnp.float32)
    weights = [
        0.1 * jax.random.normal(k_w0, (d, d), dtype=jnp.float32),
        0.1 * jax.random.normal(k_w1, (d, d), dtype=jnp.float32),
    ]
    a_hat = _make_norm_adjacency(n_nodes)

    out = group_additive_coupling_forward(x, a_hat, weights, group=group)
    out = jax.block_until_ready(out)

    ref = _reference_forward(x, a_hat, weights, group=group)
    assert out.shape == (n_nodes, feat)
    # Tolerance allows for MXU f32 pass decomposition vs. the XLA HIGHEST-precision reference path.
    assert jnp.allclose(out, ref, atol=5e-3, rtol=5e-3)

    # TODO(synk): arbitrary user-supplied func_modules (deep GCN stacks, per-group chunked *args /
    # edge features) are not translated; one deterministic linear GCN layer per group is used.
    print("KERNEL_OK")
</pallas_src>

<mosaic_0001>
module attributes {stable_mosaic.version = 11 : i64} {
  func.func @kernel(%arg0: i32, %arg1: memref<64x64xf32, #tpu.memory_space<vmem>>, %arg2: memref<64x256xf32, #tpu.memory_space<vmem>>, %arg3: memref<64x128xf32, #tpu.memory_space<vmem>>, %arg4: memref<1x128x128xf32, #tpu.memory_space<vmem>>, %arg5: memref<64x128xf32, #tpu.memory_space<vmem>>, %arg6: memref<64x128xf32, #tpu.memory_space<vmem>>) attributes {dimension_semantics = [#tpu.dimension_semantics<arbitrary>], iteration_bounds = array<i64: 2>, scalar_prefetch = 0 : i64, scratch_operands = 1 : i64, tpu.core_type = #tpu.core_type<tc>, window_params = [{pipeline_mode = #tpu.pipeline_mode<synchronous>, transform_indices = @transform_0, window_bounds = array<i64: 64, 64>}, {pipeline_mode = #tpu.pipeline_mode<synchronous>, transform_indices = @transform_1, window_bounds = array<i64: 64, 256>}, {transform_indices = @transform_2, window_bounds = array<i64: 64, 128>}, {transform_indices = @transform_3, window_bounds = array<i64: 1, 128, 128>}, {transform_indices = @transform_4, window_bounds = array<i64: 64, 128>}]} {
    %c0_i32 = arith.constant 0 : i32
    %0 = arith.cmpi eq, %arg0, %c0_i32 : i32
    %1 = arith.extui %0 : i1 to i32
    %c0_i32_0 = arith.constant 0 : i32
    %2 = arith.cmpi ne, %1, %c0_i32_0 : i32
    scf.if %2 {
      %c0_14 = arith.constant 0 : index
      %c128 = arith.constant 128 : index
      %13 = vector.load %arg2[%c0_14, %c128] : memref<64x256xf32, #tpu.memory_space<vmem>>, vector<64x128xf32>
      %c0_15 = arith.constant 0 : index
      %c0_16 = arith.constant 0 : index
      %14 = vector.load %arg6[%c0_15, %c0_16] : memref<64x128xf32, #tpu.memory_space<vmem>>, vector<64x128xf32>
      tpu.vector_store %arg6[%c0_15, %c0_16], %13 {strides = array<i32>} : memref<64x128xf32, #tpu.memory_space<vmem>>, vector<64x128xf32>,
    } else {
    }
    %c0 = arith.constant 0 : index
    %c0_1 = arith.constant 0 : index
    %3 = vector.load %arg6[%c0, %c0_1] : memref<64x128xf32, #tpu.memory_space<vmem>>, vector<64x128xf32>
    %c0_2 = arith.constant 0 : index
    %c0_3 = arith.constant 0 : index
    %c0_4 = arith.constant 0 : index
    %4 = vector.load %arg4[%c0_2, %c0_3, %c0_4] : memref<1x128x128xf32, #tpu.memory_space<vmem>>, vector<1x128x128xf32>
    %5 = vector.shape_cast %4 : vector<1x128x128xf32> to vector<128x128xf32>
    %cst = arith.constant dense<0.000000e+00> : vector<64x128xf32>
    %6 = tpu.matmul %3, %5, %cst {dimension_numbers = #tpu.dot_dimension_numbers<[1], [0], [0], [1], [0, 0, 1, 1], [], []>} : vector<64x128xf32>, vector<128x128xf32>, vector<64x128xf32> -> vector<64x128xf32>
    %c0_5 = arith.constant 0 : index
    %c0_6 = arith.constant 0 : index
    %7 = vector.load %arg1[%c0_5, %c0_6] : memref<64x64xf32, #tpu.memory_space<vmem>>, vector<64x64xf32>
    %cst_7 = arith.constant dense<0.000000e+00> : vector<64x128xf32>
    %8 = tpu.matmul %7, %6, %cst_7 {dimension_numbers = #tpu.dot_dimension_numbers<[1], [0], [0], [1], [0, 0, 1, 1], [], []>} : vector<64x64xf32>, vector<64x128xf32>, vector<64x128xf32> -> vector<64x128xf32>
    %c0_8 = arith.constant 0 : index
    %c0_9 = arith.constant 0 : index
    %9 = vector.load %arg3[%c0_8, %c0_9] : memref<64x128xf32, #tpu.memory_space<vmem>>, vector<64x128xf32>
    %10 = arith.addf %9, %8 : vector<64x128xf32>
    %c0_10 = arith.constant 0 : index
    %c0_11 = arith.constant 0 : index
    %11 = vector.load %arg5[%c0_10, %c0_11] : memref<64x128xf32, #tpu.memory_space<vmem>>, vector<64x128xf32>
    tpu.vector_store %arg5[%c0_10, %c0_11], %10 {strides = array<i32>} : memref<64x128xf32, #tpu.memory_space<vmem>>, vector<64x128xf32>,
    %c0_12 = arith.constant 0 : index
    %c0_13 = arith.constant 0 : index
    %12 = vector.load %arg6[%c0_12, %c0_13] : memref<64x128xf32, #tpu.memory_space<vmem>>, vector<64x128xf32>
    tpu.vector_store %arg6[%c0_12, %c0_13], %10 {strides = array<i32>} : memref<64x128xf32, #tpu.memory_space<vmem>>, vector<64x128xf32>,
    return
  }
  func.func @transform_0(%arg0: i32) -> (i32, i32) {
    %c0_i32 = arith.constant 0 : i32
    %c0_i32_0 = arith.constant 0 : i32
    %c0_i32_1 = arith.constant 0 : i32
    return %c0_i32, %c0_i32_0 : i32, i32
  }
  func.func @transform_1(%arg0: i32) -> (i32, i32) {
    %c0_i32 = arith.constant 0 : i32
    %c0_i32_0 = arith.constant 0 : i32
    %c0_i32_1 = arith.constant 0 : i32
    return %c0_i32, %c0_i32_0 : i32, i32
  }
  func.func @transform_2(%arg0: i32) -> (i32, i32) {
    %c0_i32 = arith.constant 0 : i32
    %c0_i32_0 = arith.constant 0 : i32
    return %c0_i32, %arg0 : i32, i32
  }
  func.func @transform_3(%arg0: i32) -> (i32, i32, i32) {
    %c0_i32 = arith.constant 0 : i32
    %c0_i32_0 = arith.constant 0 : i32
    %c0_i32_1 = arith.constant 0 : i32
    return %arg0, %c0_i32, %c0_i32_0 : i32, i32, i32
  }
  func.func @transform_4(%arg0: i32) -> (i32, i32) {
    %c0_i32 = arith.constant 0 : i32
    %c0_i32_0 = arith.constant 0 : i32
    return %c0_i32, %arg0 : i32, i32
  }
}

</mosaic_0001>

<llo_original>
// kernel: tpu_custom_call.1
$region0: #{tpu_custom_call.1}
  #allocation0 [shape = 'u32[]', space=smem, size = 0x4, offset = 0x4, fixed_abs, tag = 'smem constant byte address 0x4 - core index']
  #allocation1 [shape = 'u32[144,128]{1,0:T(1,128)}', space=vmem, size = 0x12000, scoped, tag = 'internal scratch']
  #allocation2 [shape = 'f32[64,128]{1,0:T(8,128)}', space=vmem, size = 0x8000, scoped, tag = 'scratch operand']
  %s0 = inlined_call_operand.hbm [shape: f32[64,64], index: 0, kind: input, shape index: {}]
  %s1 = inlined_call_operand.hbm [shape: f32[64,256], index: 1, kind: input, shape index: {}]
  %s2 = inlined_call_operand.hbm [shape: f32[64,256], index: 2, kind: input, shape index: {}]
  %s3 = inlined_call_operand.hbm [shape: f32[2,128,128], index: 3, kind: input, shape index: {}]
  %s4 = inlined_call_operand.hbm [shape: f32[64,256], index: 4, kind: output, shape index: {}]
  %s5 = sld [smem:[#allocation0]]
  $region69: #{tpu_custom_call.1} parent=0
    _
  %s7 = ssub.s32 1, %s5
  %s8 = scalar_select 0, %s7, %s5
  $region1: #{tpu_custom_call.1} parent=0
    #allocation3 [shape = 'u8[32768]{0}', space=vmem, size = 0x8000, scoped, tag = 'input window, operand 0, single buffered']
    #allocation4 [shape = 's32[2]{0}', space=sflag, size = 0x8, scoped, tag = 'scoped memory for tpu_custom_call.1']
    #allocation5 [shape = 's32[2]{0}', space=sflag, size = 0x8, scoped, tag = 'scoped memory for tpu_custom_call.1']
    #allocation6 [shape = 'u8[65536]{0}', space=vmem, size = 0x10000, scoped, tag = 'input window, operand 1, single buffered']
    #allocation7 [shape = 's32[1]{0}', space=sflag, size = 0x4, scoped, tag = 'scoped memory for tpu_custom_call.1']
    #allocation8 [shape = 'u8[65536]{0}', space=vmem, size = 0x10000, scoped, tag = 'input window, operand 2']
    #allocation9 [shape = 'u8[131072]{0}', space=vmem, size = 0x20000, scoped, tag = 'input window, operand 3']
    #allocation10 [shape = 'u8[65536]{0}', space=vmem, size = 0x10000, scoped, tag = 'output window, operand 0']
    %9 = vsyncpa [#allocation4], 0
    %10 = vsyncpa [#allocation7], 0
    %11 = vsyncpa [#allocation5], 0
    %s12 = scalar_lea.sflag [#allocation5], 1
    %13 = vsyncpa %s12, 0
    loop: start=0, step=1, limit=4
    $region2: #{tpu_custom_call.1} parent=1 // loop_pre_header
      _
    $region3: #{tpu_custom_call.1} parent=1 // loop_header
      %s15 = sphi 0, %s19
      %p16 = scmp.ge.s32.totalorder %s15, 4
      %s23 = sphi 0, %s23
      %s25 = sphi 0, %s23
      %s26 = sphi 0, %s25
      %s40 = sphi 0, %s26
      %s44 = sphi 0, %s44
      %s46 = sphi 0, %s44
      %s47 = sphi 0, %s46
      %s61 = sphi 0, %s47
      %s67 = sphi 0, %s69
      %s70 = sphi 0, %s67
      %s71 = sphi 0, %s70
      %s87 = sphi 0, %s71
      %s93 = sphi 0, %s95
      %s96 = sphi 0, %s93
      %s97 = sphi 0, %s96
      %s113 = sphi 0, %s97
      %s119 = sphi 0, %s121
      %s122 = sphi 0, %s119
      %s123 = sphi 0, %s122
      %s139 = sphi 0, %s123
    $region4: #{tpu_custom_call.1} parent=1 // loop_header_branch
      %18 = sbr.rel (%p16) target = $region8
    $region5: #{tpu_custom_call.1} parent=1 // loop_body
      %s20 = ssub.s32 %s15, 1
      %s21 = ssub.s32 %s15, 2
      %s22 = sadd.s32 %s15, 1
      %s24 = sadd.s32 %s23, 1
      %p27 = scmp.eq.s32.totalorder %s15, 1
      %p28 = scmp.ne.s32.totalorder %s23, %s25
      %p29 = scmp.eq.s32.totalorder %s15, 0
      %p30 = por %p28, %p29
      %p31 = scmp.ne.s32.totalorder %s23, %s25
      %p32 = scmp.eq.s32.totalorder %s20, 1
      %p33 = por %p31, %p32
      %p34 = scmp.ne.s32.totalorder %s25, %s26
      %p35 = scmp.eq.s32.totalorder %s20, 0
      %p36 = por %p34, %p35
      %p37 = scmp.ne.s32.totalorder %s25, %s26
      %p38 = scmp.eq.s32.totalorder %s21, 1
      %p39 = por %p37, %p38
      %p41 = scmp.ne.s32.totalorder %s26, %s40
      %p42 = scmp.eq.s32.totalorder %s21, 0
      %p43 = por %p41, %p42
      %s45 = sadd.s32 %s44, 1
      %p48 = scmp.eq.s32.totalorder %s15, 1
      %p49 = scmp.ne.s32.totalorder %s44, %s46
      %p50 = scmp.eq.s32.totalorder %s15, 0
      %p51 = por %p49, %p50
      %p52 = scmp.ne.s32.totalorder %s44, %s46
      %p53 = scmp.eq.s32.totalorder %s20, 1
      %p54 = por %p52, %p53
      %p55 = scmp.ne.s32.totalorder %s46, %s47
      %p56 = scmp.eq.s32.totalorder %s20, 0
      %p57 = por %p55, %p56
      %p58 = scmp.ne.s32.totalorder %s46, %s47
      %p59 = scmp.eq.s32.totalorder %s21, 1
      %p60 = por %p58, %p59
      %p62 = scmp.ne.s32.totalorder %s47, %s61
      %p63 = scmp.eq.s32.totalorder %s21, 0
      %p64 = por %p62, %p63
      %s65 = ssub.s32 %s15, %s22
      %p66 = scmp.eq.s32.totalorder %s65, 0
      %s68 = sadd.s32 %s67, 1
      %s69 = scalar_select %p66, %s67, %s68
      %p72 = pneg %p66
      %p73 = scmp.eq.s32.totalorder %s15, 1
      %p74 = por %p72, %p73
      %p75 = scmp.ne.s32.totalorder %s67, %s70
      %p76 = scmp.eq.s32.totalorder %s15, 0
      %p77 = por %p75, %p76
      %p78 = scmp.ne.s32.totalorder %s67, %s70
      %p79 = scmp.eq.s32.totalorder %s20, 1
      %p80 = por %p78, %p79
      %p81 = scmp.ne.s32.totalorder %s70, %s71
      %p82 = scmp.eq.s32.totalorder %s20, 0
      %p83 = por %p81, %p82
      %p84 = scmp.ne.s32.totalorder %s70, %s71
      %p85 = scmp.eq.s32.totalorder %s21, 1
      %p86 = por %p84, %p85
      %p88 = scmp.ne.s32.totalorder %s71, %s87
      %p89 = scmp.eq.s32.totalorder %s21, 0
      %p90 = por %p88, %p89
      %s91 = ssub.s32 %s15, %s22
      %p92 = scmp.eq.s32.totalorder %s91, 0
      %s94 = sadd.s32 %s93, 1
      %s95 = scalar_select %p92, %s93, %s94
      %p98 = pneg %p92
      %p99 = scmp.eq.s32.totalorder %s15, 1
      %p100 = por %p98, %p99
      %p101 = scmp.ne.s32.totalorder %s93, %s96
      %p102 = scmp.eq.s32.totalorder %s15, 0
      %p103 = por %p101, %p102
      %p104 = scmp.ne.s32.totalorder %s93, %s96
      %p105 = scmp.eq.s32.totalorder %s20, 1
      %p106 = por %p104, %p105
      %p107 = scmp.ne.s32.totalorder %s96, %s97
      %p108 = scmp.eq.s32.totalorder %s20, 0
      %p109 = por %p107, %p108
      %p110 = scmp.ne.s32.totalorder %s96, %s97
      %p111 = scmp.eq.s32.totalorder %s21, 1
      %p112 = por %p110, %p111
      %p114 = scmp.ne.s32.totalorder %s97, %s113
      %p115 = scmp.eq.s32.totalorder %s21, 0
      %p116 = por %p114, %p115
      %s117 = ssub.s32 %s15, %s22
      %p118 = scmp.eq.s32.totalorder %s117, 0
      %s120 = sadd.s32 %s119, 1
      %s121 = scalar_select %p118, %s119, %s120
      %p124 = pneg %p118
      %p125 = scmp.eq.s32.totalorder %s15, 1
      %p126 = por %p124, %p125
      %p127 = scmp.ne.s32.totalorder %s119, %s122
      %p128 = scmp.eq.s32.totalorder %s15, 0
      %p129 = por %p127, %p128
      %p130 = scmp.ne.s32.totalorder %s119, %s122
      %p131 = scmp.eq.s32.totalorder %s20, 1
      %p132 = por %p130, %p131
      %p133 = scmp.ne.s32.totalorder %s122, %s123
      %p134 = scmp.eq.s32.totalorder %s20, 0
      %p135 = por %p133, %p134
      %p136 = scmp.ne.s32.totalorder %s122, %s123
      %p137 = scmp.eq.s32.totalorder %s21, 1
      %p138 = por %p136, %p137
      %p140 = scmp.ne.s32.totalorder %s123, %s139
      %p141 = scmp.eq.s32.totalorder %s21, 0
      %p142 = por %p140, %p141
      %p143 = scmp.le.s32.totalorder 1, %s15
      %p144 = scmp.lt.s32.totalorder %s15, 3
      %p145 = pnand %p143, %p144
      %p146 = pneg %p145
      // Predicated region
      $region9: #{tpu_custom_call.1} parent=5 // pred_check
        _
      $region10: #{tpu_custom_call.1} parent=5 // pred_check_branch
        %148 = sbr.rel (%p145) target = $region12
      $region11: #{tpu_custom_call.1} parent=5 // pred_region
        %s149 = ssub.s32 %s15, 1
        // Predicated region
        $region13: #{tpu_custom_call.1} parent=11 // pred_check
          %p150 = pneg %p36
        $region14: #{tpu_custom_call.1} parent=11 // pred_check_branch
          %152 = sbr.rel (%p150) target = $region16
        $region15: #{tpu_custom_call.1} parent=11 // pred_region
          %s154 = ssub.s32 1024, 1024
          %155 = vsyncadd [#allocation4], %s154
          %s156 = sshll.u32 [#allocation3], 4
          %s157 = int_to_ptr.vmem [resolvable:$true] %s156
          %162 = dma.hbm_to_vmem [thread:$0]  %s0, 1024, %s157, [#allocation4], 128, 128, 8
        $region16: #{tpu_custom_call.1} parent=11 // pred_fallthru
          _
        // Predicated region
        $region17: #{tpu_custom_call.1} parent=11 // pred_check
          %p163 = pneg %p57
        $region18: #{tpu_custom_call.1} parent=11 // pred_check_branch
          %165 = sbr.rel (%p163) target = $region20
        $region19: #{tpu_custom_call.1} parent=11 // pred_region
          %s167 = ssub.s32 2048, 2048
          %168 = vsyncadd [#allocation7], %s167
          %s169 = sshll.u32 [#allocation6], 4
          %s170 = int_to_ptr.vmem [resolvable:$true] %s169
          %175 = dma.hbm_to_vmem [thread:$0]  %s1, 2048, %s170, [#allocation7], 256, 256, 16
        $region20: #{tpu_custom_call.1} parent=11 // pred_fallthru
          _
      $region12: #{tpu_custom_call.1} parent=5 // pred_fallthru
        _
      %p176 = scmp.lt.s32.totalorder %s15, 2
      // Predicated region
      $region21: #{tpu_custom_call.1} parent=5 // pred_check
        %p177 = pneg %p176
      $region22: #{tpu_custom_call.1} parent=5 // pred_check_branch
        %179 = sbr.rel (%p177) target = $region24
      $region23: #{tpu_custom_call.1} parent=5 // pred_region
        // Predicated region
        $region25: #{tpu_custom_call.1} parent=23 // pred_check
          %p180 = pneg %p77
        $region26: #{tpu_custom_call.1} parent=23 // pred_check_branch
          %182 = sbr.rel (%p180) target = $region28
        $region27: #{tpu_custom_call.1} parent=23 // pred_region
          %s183 = sand.u32 %s15, 1
          %s184 = scalar_lea.sflag [#allocation4], %s183
          %s185 = sand.u32 %s67, 1
          %s186 = smul.addr %s185, 64
          %s187 = scalar_lea.vmem [#allocation8], %s186
          %s189 = ssub.s32 1024, 1024
          %190 = vsyncadd %s184, %s189
          %s191 = smul.addr %s15, 128
          %s192 = scalar_lea.hbm %s2, %s191
          %s193 = sshll.u32 %s187, 4
          %s194 = int_to_ptr.vmem [resolvable:$true] %s193
          %199 = dma.hbm_to_vmem [thread:$0]  %s192, 1024, %s194, %s184, 256, 128, 8
        $region28: #{tpu_custom_call.1} parent=23 // pred_fallthru
          _
        // Predicated region
        $region29: #{tpu_custom_call.1} parent=23 // pred_check
          %p200 = pneg %p103
        $region30: #{tpu_custom_call.1} parent=23 // pred_check_branch
          %202 = sbr.rel (%p200) target = $region32
        $region31: #{tpu_custom_call.1} parent=23 // pred_region
          %s203 = sand.u32 %s15, 1
          %s204 = scalar_lea.sflag [#allocation4], %s203
          %s205 = sand.u32 %s93, 1
          %s206 = smul.addr %s205, 128
          %s207 = scalar_lea.vmem [#allocation9], %s206
          %s209 = ssub.s32 2048, 2048
          %210 = vsyncadd %s204, %s209
          %s211 = smul.addr %s15, 16
          %s212 = smul.addr %s211, 128
          %s213 = scalar_lea.hbm %s3, %s212
          %s214 = sshll.u32 %s207, 4
          %s215 = int_to_ptr.vmem [resolvable:$true] %s214
          %220 = dma.hbm_to_vmem [thread:$0]  %s213, 2048, %s215, %s204, 128, 128, 8
        $region32: #{tpu_custom_call.1} parent=23 // pred_fallthru
          _
      $region24: #{tpu_custom_call.1} parent=5 // pred_fallthru
        _
      %p221 = scmp.le.s32.totalorder 1, %s15
      %p222 = scmp.lt.s32.totalorder %s15, 3
      %p223 = pnand %p221, %p222
      %p224 = pneg %p223
      // Predicated region
      $region33: #{tpu_custom_call.1} parent=5 // pred_check
        _
      $region34: #{tpu_custom_call.1} parent=5 // pred_check_branch
        %226 = sbr.rel (%p223) target = $region36
      $region35: #{tpu_custom_call.1} parent=5 // pred_region
        %s227 = ssub.s32 %s15, 1
        // Predicated region
        $region37: #{tpu_custom_call.1} parent=35 // pred_check
          %p228 = pneg %p36
        $region38: #{tpu_custom_call.1} parent=35 // pred_check_branch
          %230 = sbr.rel (%p228) target = $region40
        $region39: #{tpu_custom_call.1} parent=35 // pred_region
          %231 = dma.done [#allocation4], 1024
        $region40: #{tpu_custom_call.1} parent=35 // pred_fallthru
          _
        // Predicated region
        $region41: #{tpu_custom_call.1} parent=35 // pred_check
          %p232 = pneg %p57
        $region42: #{tpu_custom_call.1} parent=35 // pred_check_branch
          %234 = sbr.rel (%p232) target = $region44
        $region43: #{tpu_custom_call.1} parent=35 // pred_region
          %235 = dma.done [#allocation7], 2048
        $region44: #{tpu_custom_call.1} parent=35 // pred_fallthru
          _
        %s236 = sand.u32 %s20, 1
        %s237 = scalar_lea.sflag [#allocation4], %s236
        %s238 = sand.u32 %s70, 1
        %s239 = smul.addr %s238, 64
        %s240 = scalar_lea.vmem [#allocation8], %s239
        // Predicated region
        $region45: #{tpu_custom_call.1} parent=35 // pred_check
          %p241 = pneg %p83
        $region46: #{tpu_custom_call.1} parent=35 // pred_check_branch
          %243 = sbr.rel (%p241) target = $region48
        $region47: #{tpu_custom_call.1} parent=35 // pred_region
          %244 = dma.done %s237, 1024
        $region48: #{tpu_custom_call.1} parent=35 // pred_fallthru
          _
        %s245 = sand.u32 %s20, 1
        %s246 = scalar_lea.sflag [#allocation4], %s245
        %s247 = sand.u32 %s96, 1
        %s248 = smul.addr %s247, 128
        %s249 = scalar_lea.vmem [#allocation9], %s248
        // Predicated region
        $region49: #{tpu_custom_call.1} parent=35 // pred_check
          %p250 = pneg %p109
        $region50: #{tpu_custom_call.1} parent=35 // pred_check_branch
          %252 = sbr.rel (%p250) target = $region52
        $region51: #{tpu_custom_call.1} parent=35 // pred_region
          %253 = dma.done %s246, 2048
        $region52: #{tpu_custom_call.1} parent=35 // pred_fallthru
          _
        %p254 = pneg %p36
        %p255 = pneg %p33
        %p256 = pneg %p57
        %p257 = pneg %p54
        %s258 = sand.u32 %s20, 1
        %s259 = scalar_lea.sflag [#allocation4], %s258
        %s260 = sand.u32 %s70, 1
        %s261 = smul.addr %s260, 64
        %s262 = scalar_lea.vmem [#allocation8], %s261
        %p263 = pneg %p83
        %p264 = pneg %p80
        %s265 = sand.u32 %s20, 1
        %s266 = scalar_lea.sflag [#allocation4], %s265
        %s267 = sand.u32 %s96, 1
        %s268 = smul.addr %s267, 128
        %s269 = scalar_lea.vmem [#allocation9], %s268
        %p270 = pneg %p109
        %p271 = pneg %p106
        %p272 = pneg %p135
        %p273 = pneg %p132
        %s274 = sand.u32 %s122, 1
        %s275 = scalar_lea.sflag [#allocation5], %s274
        %s276 = sand.u32 %s122, 1
        %s277 = smul.addr %s276, 64
        %s278 = scalar_lea.vmem [#allocation10], %s277
        %p279 = scmp.eq.s32.totalorder %s20, 0
        // Predicated region
        $region53: #{tpu_custom_call.1} parent=35 // pred_check
          %p280 = pneg %p279
        $region54: #{tpu_custom_call.1} parent=35 // pred_check_branch
          %282 = sbr.rel (%p280) target = $region56
        $region55: #{tpu_custom_call.1} parent=35 // pred_region
          %v283 = vld [vmem:[#allocation6 + $0x8] sm:$0xff]
          %v284 = vld [vmem:[#allocation6 + $0x18] sm:$0xff]
          %v285 = vld [vmem:[#allocation6 + $0x28] sm:$0xff]
          %v286 = vld [vmem:[#allocation6 + $0x38] sm:$0xff]
          %v287 = vld [vmem:[#allocation6 + $0x48] sm:$0xff]
          %v288 = vld [vmem:[#allocation6 + $0x58] sm:$0xff]
          %v289 = vld [vmem:[#allocation6 + $0x68] sm:$0xff]
          %v290 = vld [vmem:[#allocation6 + $0x78] sm:$0xff]
          %291 = vst [vmem:[#allocation2] sm:$0xff] %v283
          %292 = vst [vmem:[#allocation2 + $0x8] sm:$0xff] %v284
          %293 = vst [vmem:[#allocation2 + $0x10] sm:$0xff] %v285
          %294 = vst [vmem:[#allocation2 + $0x18] sm:$0xff] %v286
          %295 = vst [vmem:[#allocation2 + $0x20] sm:$0xff] %v287
          %296 = vst [vmem:[#allocation2 + $0x28] sm:$0xff] %v288
          %297 = vst [vmem:[#allocation2 + $0x30] sm:$0xff] %v289
          %298 = vst [vmem:[#allocation2 + $0x38] sm:$0xff] %v290
        $region56: #{tpu_custom_call.1} parent=35 // pred_fallthru
          _
        %v299 = vld [vmem:[#allocation2] sm:$0xff]
        %v300 = vld [vmem:[#allocation2 + $0x8] sm:$0xff]
        %v301 = vld [vmem:[#allocation2 + $0x10] sm:$0xff]
        %v302 = vld [vmem:[#allocation2 + $0x18] sm:$0xff]
        %v303 = vld [vmem:[#allocation2 + $0x20] sm:$0xff]
        %v304 = vld [vmem:[#allocation2 + $0x28] sm:$0xff]
        %v305 = vld [vmem:[#allocation2 + $0x30] sm:$0xff]
        %v306 = vld [vmem:[#allocation2 + $0x38] sm:$0xff]
        %v307 = vld [vmem:[%s249] sm:$0xff]
        %v308 = vld [vmem:[%s249 + $0x8] sm:$0xff]
        %v309 = vld [vmem:[%s249 + $0x10] sm:$0xff]
        %v310 = vld [vmem:[%s249 + $0x18] sm:$0xff]
        %v311 = vld [vmem:[%s249 + $0x20] sm:$0xff]
        %v312 = vld [vmem:[%s249 + $0x28] sm:$0xff]
        %v313 = vld [vmem:[%s249 + $0x30] sm:$0xff]
        %v314 = vld [vmem:[%s249 + $0x38] sm:$0xff]
        %v315 = vld [vmem:[%s249 + $0x40] sm:$0xff]
        %v316 = vld [vmem:[%s249 + $0x48] sm:$0xff]
        %v317 = vld [vmem:[%s249 + $0x50] sm:$0xff]
        %v318 = vld [vmem:[%s249 + $0x58] sm:$0xff]
        %v319 = vld [vmem:[%s249 + $0x60] sm:$0xff]
        %v320 = vld [vmem:[%s249 + $0x68] sm:$0xff]
        %v321 = vld [vmem:[%s249 + $0x70] sm:$0xff]
        %v322 = vld [vmem:[%s249 + $0x78] sm:$0xff]
        %323 = vmatprep.subr.mxu0 0.0
        %324 = vmatpush1.msra.mxu0 %v322
        %325 = vmatprep.subr.mxu0 0.0
        %326 = vmatpush1.msra.mxu0 %v321
        %327 = vmatprep.subr.mxu0 0.0
        %328 = vmatpush1.msra.mxu0 %v320
        %329 = vmatprep.subr.mxu0 0.0
        %330 = vmatpush1.msra.mxu0 %v319
        %331 = vmatprep.subr.mxu0 0.0
        %332 = vmatpush1.msra.mxu0 %v318
        %333 = vmatprep.subr.mxu0 0.0
        %334 = vmatpush1.msra.mxu0 %v317
        %335 = vmatprep.subr.mxu0 0.0
        %336 = vmatpush1.msra.mxu0 %v316
        %337 = vmatprep.subr.mxu0 0.0
        %338 = vmatpush1.msra.mxu0 %v315
        %339 = vmatprep.subr.mxu0 0.0
        %340 = vmatpush1.msra.mxu0 %v314
        %341 = vmatprep.subr.mxu0 0.0
        %342 = vmatpush1.msra.mxu0 %v313
        %343 = vmatprep.subr.mxu0 0.0
        %344 = vmatpush1.msra.mxu0 %v312
        %345 = vmatprep.subr.mxu0 0.0
        %346 = vmatpush1.msra.mxu0 %v311
        %347 = vmatprep.subr.mxu0 0.0
        %348 = vmatpush1.msra.mxu0 %v310
        %349 = vmatprep.subr.mxu0 0.0
        %350 = vmatpush1.msra.mxu0 %v309
        %351 = vmatprep.subr.mxu0 0.0
        %352 = vmatpush1.msra.mxu0 %v308
        %353 = vmatprep.subr.mxu0 0.0
        %354 = vmatpush1.msra.mxu0 %v307
        %355 = vmatprep.subr.mxu0 0.0
        %356 = vmatpush2.msra.mxu0 0.0
        %357 = vmatprep.subr.mxu0 0.0
        %358 = vmatpush2.msra.mxu0 0.0
        %359 = vmatprep.subr.mxu0 0.0
        %360 = vmatpush2.msra.mxu0 0.0
        %361 = vmatprep.subr.mxu0 0.0
        %362 = vmatpush2.msra.mxu0 0.0
        %363 = vmatprep.subr.mxu0 0.0
        %364 = vmatpush2.msra.mxu0 0.0
        %365 = vmatprep.subr.mxu0 0.0
        %366 = vmatpush2.msra.mxu0 0.0
        %367 = vmatprep.subr.mxu0 0.0
        %368 = vmatpush2.msra.mxu0 0.0
        %369 = vmatprep.subr.mxu0 0.0
        %370 = vmatpush2.msra.mxu0 0.0
        %371 = vmatprep.subr.mxu0 0.0
        %372 = vmatpush2.msra.mxu0 0.0
        %373 = vmatprep.subr.mxu0 0.0
        %374 = vmatpush2.msra.mxu0 0.0
        %375 = vmatprep.subr.mxu0 0.0
        %376 = vmatpush2.msra.mxu0 0.0
        %377 = vmatprep.subr.mxu0 0.0
        %378 = vmatpush2.msra.mxu0 0.0
        %379 = vmatprep.subr.mxu0 0.0
        %380 = vmatpush2.msra.mxu0 0.0
        %381 = vmatprep.subr.mxu0 0.0
        %382 = vmatpush2.msra.mxu0 0.0
        %383 = vmatprep.subr.mxu0 0.0
        %384 = vmatpush2.msra.mxu0 0.0
        %385 = vmatprep.subr.mxu0 0.0
        %386 = vmatpush2.msra.mxu0 0.0
        %387 = vmatprep.mubr.f32.mxu0 0.0
        %388 = vmatmul.mubr.f32.gmra.mxu0 %v299
        %v389 = vpop.f32.mrf.mxu0
        %v390 = vadd.f32 0.0, %v389
        %v391 = vpop.f32.mrf.mxu0
        %392 = vmatprep.mubr.f32.mxu0 0.0
        %393 = vmatmul.mubr.f32.gmra.mxu0 %v300
        %v394 = vpop.f32.mrf.mxu0
        %v395 = vadd.f32 0.0, %v394
        %v396 = vpop.f32.mrf.mxu0
        %397 = vmatprep.mubr.f32.mxu0 0.0
        %398 = vmatmul.mubr.f32.gmra.mxu0 %v301
        %v399 = vpop.f32.mrf.mxu0
        %v400 = vadd.f32 0.0, %v399
        %v401 = vpop.f32.mrf.mxu0
        %402 = vmatprep.mubr.f32.mxu0 0.0
        %403 = vmatmul.mubr.f32.gmra.mxu0 %v302
        %v404 = vpop.f32.mrf.mxu0
        %v405 = vadd.f32 0.0, %v404
        %v406 = vpop.f32.mrf.mxu0
        %407 = vmatprep.mubr.f32.mxu0 0.0
        %408 = vmatmul.mubr.f32.gmra.mxu0 %v303
        %v409 = vpop.f32.mrf.mxu0
        %v410 = vadd.f32 0.0, %v409
        %v411 = vpop.f32.mrf.mxu0
        %412 = vmatprep.mubr.f32.mxu0 0.0
        %413 = vmatmul.mubr.f32.gmra.mxu0 %v304
        %v414 = vpop.f32.mrf.mxu0
        %v415 = vadd.f32 0.0, %v414
        %v416 = vpop.f32.mrf.mxu0
        %417 = vmatprep.mubr.f32.mxu0 0.0
        %418 = vmatmul.mubr.f32.gmra.mxu0 %v305
        %v419 = vpop.f32.mrf.mxu0
        %v420 = vadd.f32 0.0, %v419
        %v421 = vpop.f32.mrf.mxu0
        %422 = vmatprep.mubr.f32.mxu0 0.0
        %423 = vmatmul.mubr.f32.gmra.mxu0 %v306
        %v424 = vpop.f32.mrf.mxu0
        %v425 = vadd.f32 0.0, %v424
        %v426 = vpop.f32.mrf.mxu0
        %427 = vdwg.mxu0
        %v428 = vld [vmem:[#allocation3] sm:$0xff]
        %v429 = vld [vmem:[#allocation3 + $0x8] sm:$0xff]
        %v430 = vld [vmem:[#allocation3 + $0x10] sm:$0xff]
        %v431 = vld [vmem:[#allocation3 + $0x18] sm:$0xff]
        %v432 = vld [vmem:[#allocation3 + $0x20] sm:$0xff]
        %v433 = vld [vmem:[#allocation3 + $0x28] sm:$0xff]
        %v434 = vld [vmem:[#allocation3 + $0x30] sm:$0xff]
        %v435 = vld [vmem:[#allocation3 + $0x38] sm:$0xff]
        %vm436 = vcmask 523264
        %v438 = vsel %vm436, %v428, 0
        %v441 = vsel %vm436, %v429, 0
        %v444 = vsel %vm436, %v430, 0
        %v447 = vsel %vm436, %v431, 0
        %v450 = vsel %vm436, %v432, 0
        %v453 = vsel %vm436, %v433, 0
        %v456 = vsel %vm436, %v434, 0
        %v459 = vsel %vm436, %v435, 0
        %461 = vmatprep.subr.mxu0 0.0
        %462 = vmatpush1.msra.mxu0 0.0
        %463 = vmatprep.subr.mxu0 0.0
        %464 = vmatpush1.msra.mxu0 0.0
        %465 = vmatprep.subr.mxu0 0.0
        %466 = vmatpush1.msra.mxu0 0.0
        %467 = vmatprep.subr.mxu0 0.0
        %468 = vmatpush1.msra.mxu0 0.0
        %469 = vmatprep.subr.mxu0 0.0
        %470 = vmatpush1.msra.mxu0 0.0
        %471 = vmatprep.subr.mxu0 0.0
        %472 = vmatpush1.msra.mxu0 0.0
        %473 = vmatprep.subr.mxu0 0.0
        %474 = vmatpush1.msra.mxu0 0.0
        %475 = vmatprep.subr.mxu0 0.0
        %476 = vmatpush1.msra.mxu0 0.0
        %477 = vmatprep.subr.mxu0 0.0
        %478 = vmatpush1.msra.mxu0 %v425
        %479 = vmatprep.subr.mxu0 0.0
        %480 = vmatpush1.msra.mxu0 %v420
        %481 = vmatprep.subr.mxu0 0.0
        %482 = vmatpush1.msra.mxu0 %v415
        %483 = vmatprep.subr.mxu0 0.0
        %484 = vmatpush1.msra.mxu0 %v410
        %485 = vmatprep.subr.mxu0 0.0
        %486 = vmatpush1.msra.mxu0 %v405
        %487 = vmatprep.subr.mxu0 0.0
        %488 = vmatpush1.msra.mxu0 %v400
        %489 = vmatprep.subr.mxu0 0.0
        %490 = vmatpush1.msra.mxu0 %v395
        %491 = vmatprep.subr.mxu0 0.0
        %492 = vmatpush1.msra.mxu0 %v390
        %493 = vmatprep.subr.mxu0 0.0
        %494 = vmatpush2.msra.mxu0 0.0
        %495 = vmatprep.subr.mxu0 0.0
        %496 = vmatpush2.msra.mxu0 0.0
        %497 = vmatprep.subr.mxu0 0.0
        %498 = vmatpush2.msra.mxu0 0.0
        %499 = vmatprep.subr.mxu0 0.0
        %500 = vmatpush2.msra.mxu0 0.0
        %501 = vmatprep.subr.mxu0 0.0
        %502 = vmatpush2.msra.mxu0 0.0
        %503 = vmatprep.subr.mxu0 0.0
        %504 = vmatpush2.msra.mxu0 0.0
        %505 = vmatprep.subr.mxu0 0.0
        %506 = vmatpush2.msra.mxu0 0.0
        %507 = vmatprep.subr.mxu0 0.0
        %508 = vmatpush2.msra.mxu0 0.0
        %509 = vmatprep.subr.mxu0 0.0
        %510 = vmatpush2.msra.mxu0 0.0
        %511 = vmatprep.subr.mxu0 0.0
        %512 = vmatpush2.msra.mxu0 0.0
        %513 = vmatprep.subr.mxu0 0.0
        %514 = vmatpush2.msra.mxu0 0.0
        %515 = vmatprep.subr.mxu0 0.0
        %516 = vmatpush2.msra.mxu0 0.0
        %517 = vmatprep.subr.mxu0 0.0
        %518 = vmatpush2.msra.mxu0 0.0
        %519 = vmatprep.subr.mxu0 0.0
        %520 = vmatpush2.msra.mxu0 0.0
        %521 = vmatprep.subr.mxu0 0.0
        %522 = vmatpush2.msra.mxu0 0.0
        %523 = vmatprep.subr.mxu0 0.0
        %524 = vmatpush2.msra.mxu0 0.0
        %525 = vmatprep.mubr.f32.mxu0 0.0
        %526 = vmatmul.mubr.f32.gmra.mxu0 %v438
        %v527 = vpop.f32.mrf.mxu0
        %v528 = vadd.f32 0.0, %v527
        %v529 = vpop.f32.mrf.mxu0
        %530 = vmatprep.mubr.f32.mxu0 0.0
        %531 = vmatmul.mubr.f32.gmra.mxu0 %v441
        %v532 = vpop.f32.mrf.mxu0
        %v533 = vadd.f32 0.0, %v532
        %v534 = vpop.f32.mrf.mxu0
        %535 = vmatprep.mubr.f32.mxu0 0.0
        %536 = vmatmul.mubr.f32.gmra.mxu0 %v444
        %v537 = vpop.f32.mrf.mxu0
        %v538 = vadd.f32 0.0, %v537
        %v539 = vpop.f32.mrf.mxu0
        %540 = vmatprep.mubr.f32.mxu0 0.0
        %541 = vmatmul.mubr.f32.gmra.mxu0 %v447
        %v542 = vpop.f32.mrf.mxu0
        %v543 = vadd.f32 0.0, %v542
        %v544 = vpop.f32.mrf.mxu0
        %545 = vmatprep.mubr.f32.mxu0 0.0
        %546 = vmatmul.mubr.f32.gmra.mxu0 %v450
        %v547 = vpop.f32.mrf.mxu0
        %v548 = vadd.f32 0.0, %v547
        %v549 = vpop.f32.mrf.mxu0
        %550 = vmatprep.mubr.f32.mxu0 0.0
        %551 = vmatmul.mubr.f32.gmra.mxu0 %v453
        %v552 = vpop.f32.mrf.mxu0
        %v553 = vadd.f32 0.0, %v552
        %v554 = vpop.f32.mrf.mxu0
        %555 = vmatprep.mubr.f32.mxu0 0.0
        %556 = vmatmul.mubr.f32.gmra.mxu0 %v456
        %v557 = vpop.f32.mrf.mxu0
        %v558 = vadd.f32 0.0, %v557
        %v559 = vpop.f32.mrf.mxu0
        %560 = vmatprep.mubr.f32.mxu0 0.0
        %561 = vmatmul.mubr.f32.gmra.mxu0 %v459
        %v562 = vpop.f32.mrf.mxu0
        %v563 = vadd.f32 0.0, %v562
        %v564 = vpop.f32.mrf.mxu0
        %565 = vdwg.mxu0
        %v566 = vld [vmem:[%s240] sm:$0xff]
        %v567 = vld [vmem:[%s240 + $0x8] sm:$0xff]
        %v568 = vld [vmem:[%s240 + $0x10] sm:$0xff]
        %v569 = vld [vmem:[%s240 + $0x18] sm:$0xff]
        %v570 = vld [vmem:[%s240 + $0x20] sm:$0xff]
        %v571 = vld [vmem:[%s240 + $0x28] sm:$0xff]
        %v572 = vld [vmem:[%s240 + $0x30] sm:$0xff]
        %v573 = vld [vmem:[%s240 + $0x38] sm:$0xff]
        %v574 = vadd.f32 %v566, %v528
        %v575 = vadd.f32 %v567, %v533
        %v576 = vadd.f32 %v568, %v538
        %v577 = vadd.f32 %v569, %v543
        %v578 = vadd.f32 %v570, %v548
        %v579 = vadd.f32 %v571, %v553
        %v580 = vadd.f32 %v572, %v558
        %v581 = vadd.f32 %v573, %v563
        %582 = vst [vmem:[%s278] sm:$0xff] %v574
        %583 = vst [vmem:[%s278 + $0x8] sm:$0xff] %v575
        %584 = vst [vmem:[%s278 + $0x10] sm:$0xff] %v576
        %585 = vst [vmem:[%s278 + $0x18] sm:$0xff] %v577
        %586 = vst [vmem:[%s278 + $0x20] sm:$0xff] %v578
        %587 = vst [vmem:[%s278 + $0x28] sm:$0xff] %v579
        %588 = vst [vmem:[%s278 + $0x30] sm:$0xff] %v580
        %589 = vst [vmem:[%s278 + $0x38] sm:$0xff] %v581
        %590 = vst [vmem:[#allocation2] sm:$0xff] %v574
        %591 = vst [vmem:[#allocation2 + $0x8] sm:$0xff] %v575
        %592 = vst [vmem:[#allocation2 + $0x10] sm:$0xff] %v576
        %593 = vst [vmem:[#allocation2 + $0x18] sm:$0xff] %v577
        %594 = vst [vmem:[#allocation2 + $0x20] sm:$0xff] %v578
        %595 = vst [vmem:[#allocation2 + $0x28] sm:$0xff] %v579
        %596 = vst [vmem:[#allocation2 + $0x30] sm:$0xff] %v580
        %597 = vst [vmem:[#allocation2 + $0x38] sm:$0xff] %v581
        %s598 = sand.u32 %s122, 1
        %s599 = scalar_lea.sflag [#allocation5], %s598
        %s600 = sand.u32 %s122, 1
        %s601 = smul.addr %s600, 64
        %s602 = scalar_lea.vmem [#allocation10], %s601
        // Predicated region
        $region57: #{tpu_custom_call.1} parent=35 // pred_check
          %p603 = pneg %p132
        $region58: #{tpu_custom_call.1} parent=35 // pred_check_branch
          %605 = sbr.rel (%p603) target = $region60
        $region59: #{tpu_custom_call.1} parent=35 // pred_region
          %s607 = ssub.s32 1024, 1024
          %608 = vsyncadd %s599, %s607
          %s609 = smul.addr %s20, 128
          %s610 = scalar_lea.hbm %s4, %s609
          %s611 = sshll.u32 %s602, 4
          %s612 = int_to_ptr.vmem [resolvable:$true] %s611
          %617 = dma.vmem_to_hbm [thread:$0]  %s612, 1024, %s610, %s599, 128, 256, 8
        $region60: #{tpu_custom_call.1} parent=35 // pred_fallthru
          _
      $region36: #{tpu_custom_call.1} parent=5 // pred_fallthru
        _
      %p618 = scmp.le.s32.totalorder 2, %s15
      // Predicated region
      $region61: #{tpu_custom_call.1} parent=5 // pred_check
        %p619 = pneg %p618
      $region62: #{tpu_custom_call.1} parent=5 // pred_check_branch
        %621 = sbr.rel (%p619) target = $region64
      $region63: #{tpu_custom_call.1} parent=5 // pred_region
        %s622 = ssub.s32 %s15, 2
        // Predicated region
        $region65: #{tpu_custom_call.1} parent=63 // pred_check
          %p623 = pneg %p138
        $region66: #{tpu_custom_call.1} parent=63 // pred_check_branch
          %625 = sbr.rel (%p623) target = $region68
        $region67: #{tpu_custom_call.1} parent=63 // pred_region
          %s626 = sand.u32 %s123, 1
          %s627 = scalar_lea.sflag [#allocation5], %s626
          %s628 = sand.u32 %s123, 1
          %s629 = smul.addr %s628, 64
          %s630 = scalar_lea.vmem [#allocation10], %s629
          %631 = dma.done %s627, 1024
        $region68: #{tpu_custom_call.1} parent=63 // pred_fallthru
          _
      $region64: #{tpu_custom_call.1} parent=5 // pred_fallthru
        _
    $region6: #{tpu_custom_call.1} parent=1 // loop_footer
      %s19 = sadd.s32 1, %s15
    $region7: #{tpu_custom_call.1} parent=1 // loop_footer_branch
      %14 = sbr.rel target = $region3
    $region8: #{tpu_custom_call.1} parent=1 // loop_exit
      _
    %632 = vsyncpa [#allocation4], 1
    %s633 = scalar_lea.sflag [#allocation4], 1
    %634 = vsyncpa %s633, 1
    %635 = vsyncpa [#allocation7], 1
    %636 = vsyncpa [#allocation5], 1
    %s637 = scalar_lea.sflag [#allocation5], 1
    %638 = vsyncpa %s637, 1

</llo_original>
